<compile_context>
chip_gen: v6e
topology: v6e:2x2x1
jax: 0.10.0
libtpu: 0.0.40
codegen_flags: <defaults>
</compile_context>

<pallas_src>
import functools

import jax
import jax.numpy as jnp
import numpy as np
from jax.experimental import pallas as pl
from jax.experimental.pallas import tpu as pltpu


def _round_up(x, m):
    return (x + m - 1) // m * m


def _jepa_y_kernel(y_ref, wenc_ref, benc_ref, wqkv_ref, wo_ref, bo_ref,
                   out_ref, *, n_enc, e_pad, scale):
    tb = y_ref.shape[0]

    # ---- all encoders as ONE lane-dense MXU matmul: [TB,Dp] x [Dp, N*Ep] ----
    enc2d = jnp.dot(y_ref[...], wenc_ref[...],
                    preferred_element_type=jnp.float32) + benc_ref[...]
    # per-encoder activations: static 128-aligned lane slices + ReLU (VPU, f32)
    encs = [jnp.maximum(enc2d[:, n * e_pad:(n + 1) * e_pad], 0.0)
            for n in range(n_enc)]

    # ---- fused QKV projection: one [N*TB, Ep] x [Ep, 3*Ep] matmul ----
    enc_flat = jnp.concatenate(encs, axis=0)                 # [N*TB, Ep]
    qkv = jnp.dot(enc_flat, wqkv_ref[...],
                  preferred_element_type=jnp.float32)        # [N*TB, 3*Ep]
    # 1/sqrt(E) folded into q (smaller tensor than the score matrix)
    qs = [qkv[n * tb:(n + 1) * tb, 0:e_pad] * scale for n in range(n_enc)]
    ks = [qkv[n * tb:(n + 1) * tb, e_pad:2 * e_pad] for n in range(n_enc)]
    vs = [qkv[n * tb:(n + 1) * tb, 2 * e_pad:3 * e_pad] for n in range(n_enc)]

    # ---- tiny-N self-attention over the encoder axis on the VPU/XLU ----
    # N is tiny, so q@k^T and p@v are broadcast-multiply + lane reduce
    # (no per-batch micro-matmuls on the MXU).  Softmax is max-stabilized,
    # divide goes to the EUP via pl.reciprocal.
    pooled = jnp.zeros((tb, e_pad), jnp.float32)
    for n in range(n_enc):
        s_row = [jnp.sum(qs[n] * ks[m], axis=-1, keepdims=True)
                 for m in range(n_enc)]                      # each [TB, 1]
        s_max = s_row[0]
        for m in range(1, n_enc):
            s_max = jnp.maximum(s_max, s_row[m])
        p_row = [jnp.exp(s_row[m] - s_max) for m in range(n_enc)]
        denom = p_row[0]
        for m in range(1, n_enc):
            denom = denom + p_row[m]
        inv = pl.reciprocal(denom, approx=False)             # EUP slot
        attn_n = p_row[0] * vs[0]
        for m in range(1, n_enc):
            attn_n = attn_n + p_row[m] * vs[m]
        pooled = pooled + attn_n * inv
    pooled = pooled * jnp.float32(1.0 / n_enc)               # mean over encoders

    # ---- output projection AFTER pooling (mean is linear -> exact) ----
    out = jnp.dot(pooled, wo_ref[...],
                  preferred_element_type=jnp.float32) + bo_ref[...]
    out_ref[...] = out.astype(out_ref.dtype)


def jepa_y_encoder(y, params, *, block_b=256):
    """JEPA_YEncoder forward inside one batch-tiled, pipelined Pallas kernel."""
    f32 = jnp.float32
    B, D_in = y.shape
    N, _, E = params['wenc'].shape

    # pad feature dims to lane multiples (128); batch tile to sublane mult (8)
    Dp = _round_up(D_in, 128)
    Ep = _round_up(E, 128)
    TB = _round_up(min(block_b, _round_up(B, 8)), 8)
    Bp = _round_up(B, TB)

    # ---- pack / zero-pad inputs & weights (padding is exact: pads are 0) ----
    y_p = jnp.zeros((Bp, Dp), f32).at[:B, :D_in].set(y.astype(f32))
    wenc = jnp.zeros((N, Dp, Ep), f32).at[:, :D_in, :E].set(params['wenc'])
    wenc2d = jnp.transpose(wenc, (1, 0, 2)).reshape(Dp, N * Ep)   # [Dp, N*Ep]
    benc = jnp.zeros((N, Ep), f32).at[:, :E].set(params['benc']).reshape(1, N * Ep)

    def pad_sq(w):
        return jnp.zeros((Ep, Ep), f32).at[:E, :E].set(w)

    wqkv = jnp.concatenate([pad_sq(params['wq']), pad_sq(params['wk']),
                            pad_sq(params['wv'])], axis=1)        # [Ep, 3*Ep]
    wo = pad_sq(params['wo'])                                     # [Ep, Ep]
    bo = jnp.zeros((1, Ep), f32).at[0, :E].set(params['bo'])

    kernel = functools.partial(_jepa_y_kernel, n_enc=N, e_pad=Ep,
                               scale=1.0 / float(np.sqrt(E)))

    flops = (2 * Bp * Dp * N * Ep          # encoder matmul
             + 2 * (N * Bp) * Ep * 3 * Ep  # fused QKV
             + 4 * Bp * N * N * Ep         # scores + attn-weighted sum
             + 2 * Bp * Ep * Ep)           # output projection
    bytes_accessed = 4 * (Bp * Dp + Dp * N * Ep + N * Ep
                          + Ep * 3 * Ep + Ep * Ep + Ep + Bp * Ep)
    cost = pl.CostEstimate(flops=flops,
                           transcendentals=Bp * N * (N + 1),
                           bytes_accessed=bytes_accessed)

    out = pl.pallas_call(
        kernel,
        out_shape=jax.ShapeDtypeStruct((Bp, Ep), f32),
        grid=(Bp // TB,),
        in_specs=[
            pl.BlockSpec((TB, Dp), lambda i: (i, 0)),        # y tile (pipelined)
            pl.BlockSpec((Dp, N * Ep), lambda i: (0, 0)),    # encoder weights (resident)
            pl.BlockSpec((1, N * Ep), lambda i: (0, 0)),     # encoder biases
            pl.BlockSpec((Ep, 3 * Ep), lambda i: (0, 0)),    # fused Wq|Wk|Wv
            pl.BlockSpec((Ep, Ep), lambda i: (0, 0)),        # Wo
            pl.BlockSpec((1, Ep), lambda i: (0, 0)),         # bo
        ],
        out_specs=pl.BlockSpec((TB, Ep), lambda i: (i, 0)),  # lane-dense [TB,Ep]
        compiler_params=pltpu.CompilerParams(
            dimension_semantics=("parallel",),               # megacore on v7x
            vmem_limit_bytes=48 * 1024 * 1024),              # fits v7x 64 MiB
        cost_estimate=cost,
    )(y_p, wenc2d, benc, wqkv, wo, bo)

    return out[:B, :E]


def jepa_y_ref(y, p):
    """Pure-JAX reference (mirrors the PyTorch semantics of the chosen submodules)."""
    enc = jnp.maximum(
        jnp.einsum('bd,nde->bne', y, p['wenc']) + p['benc'][None, :, :], 0.0)
    q = jnp.einsum('bne,ef->bnf', enc, p['wq'])
    k = jnp.einsum('bne,ef->bnf', enc, p['wk'])
    v = jnp.einsum('bne,ef->bnf', enc, p['wv'])
    s = jnp.einsum('bnf,bmf->bnm', q, k) / jnp.sqrt(jnp.float32(q.shape[-1]))
    a = jax.nn.softmax(s, axis=-1)
    attn = jnp.einsum('bnm,bme->bne', a, v)
    out = jnp.einsum('bne,ef->bnf', attn, p['wo']) + p['bo'][None, None, :]
    return out.mean(axis=1)


def make_params(key, n_enc, d_in, embed_dim):
    ks = jax.random.split(key, 7)
    scale_enc = 1.0 / np.sqrt(d_in)
    scale_att = 1.0 / np.sqrt(embed_dim)
    return {
        'wenc': jax.random.normal(ks[0], (n_enc, d_in, embed_dim), jnp.float32) * scale_enc,
        'benc': jax.random.normal(ks[1], (n_enc, embed_dim), jnp.float32) * 0.01,
        'wq':   jax.random.normal(ks[2], (embed_dim, embed_dim), jnp.float32) * scale_att,
        'wk':   jax.random.normal(ks[3], (embed_dim, embed_dim), jnp.float32) * scale_att,
        'wv':   jax.random.normal(ks[4], (embed_dim, embed_dim), jnp.float32) * scale_att,
        'wo':   jax.random.normal(ks[5], (embed_dim, embed_dim), jnp.float32) * scale_att,
        'bo':   jax.random.normal(ks[6], (embed_dim,), jnp.float32) * 0.01,
    }


if __name__ == "__main__":
    B, D_IN, EMBED_DIM, N_ENC = 16, 16, 32, 3

    key = jax.random.PRNGKey(0)
    k_y, k_p = jax.random.split(key)
    y = jax.random.normal(k_y, (B, D_IN), jnp.float32)
    params = make_params(k_p, N_ENC, D_IN, EMBED_DIM)

    # block_b=8 -> grid=(2,) so the batch pipeline / parallel axis is exercised
    y_embed = jax.block_until_ready(jepa_y_encoder(y, params, block_b=8))

    y_ref_out = jax.block_until_ready(jepa_y_ref(y, params))
    np.testing.assert_allclose(np.asarray(y_embed), np.asarray(y_ref_out),
                               rtol=1e-5, atol=1e-5)
    assert y_embed.shape == (B, EMBED_DIM)
    print("KERNEL_OK")
</pallas_src>

<mosaic_0001>
module attributes {stable_mosaic.version = 11 : i64} {
  func.func @_jepa_y_kernel(%arg0: i32, %arg1: memref<8x128xf32, #tpu.memory_space<vmem>>, %arg2: memref<128x384xf32, #tpu.memory_space<vmem>>, %arg3: memref<1x384xf32, #tpu.memory_space<vmem>>, %arg4: memref<128x384xf32, #tpu.memory_space<vmem>>, %arg5: memref<128x128xf32, #tpu.memory_space<vmem>>, %arg6: memref<1x128xf32, #tpu.memory_space<vmem>>, %arg7: memref<8x128xf32, #tpu.memory_space<vmem>>) attributes {dimension_semantics = [#tpu.dimension_semantics<parallel>], iteration_bounds = array<i64: 2>, scalar_prefetch = 0 : i64, scratch_operands = 0 : i64, tpu.core_type = #tpu.core_type<tc>, window_params = [{transform_indices = @transform_0, window_bounds = array<i64: 8, 128>}, {pipeline_mode = #tpu.pipeline_mode<synchronous>, transform_indices = @transform_1, window_bounds = array<i64: 128, 384>}, {pipeline_mode = #tpu.pipeline_mode<synchronous>, transform_indices = @transform_2, window_bounds = array<i64: 1, 384>}, {pipeline_mode = #tpu.pipeline_mode<synchronous>, transform_indices = @transform_3, window_bounds = array<i64: 128, 384>}, {pipeline_mode = #tpu.pipeline_mode<synchronous>, transform_indices = @transform_4, window_bounds = array<i64: 128, 128>}, {pipeline_mode = #tpu.pipeline_mode<synchronous>, transform_indices = @transform_5, window_bounds = array<i64: 1, 128>}, {transform_indices = @transform_6, window_bounds = array<i64: 8, 128>}]} {
    %c0 = arith.constant 0 : index
    %c0_0 = arith.constant 0 : index
    %0 = vector.load %arg1[%c0, %c0_0] : memref<8x128xf32, #tpu.memory_space<vmem>>, vector<8x128xf32>
    %c0_1 = arith.constant 0 : index
    %c0_2 = arith.constant 0 : index
    %1 = vector.load %arg2[%c0_1, %c0_2] : memref<128x384xf32, #tpu.memory_space<vmem>>, vector<128x384xf32>
    %cst = arith.constant dense<0.000000e+00> : vector<8x384xf32>
    %2 = tpu.matmul %0, %1, %cst {dimension_numbers = #tpu.dot_dimension_numbers<[1], [0], [0], [1], [0, 0, 1, 1], [], []>} : vector<8x128xf32>, vector<128x384xf32>, vector<8x384xf32> -> vector<8x384xf32>
    %c0_3 = arith.constant 0 : index
    %c0_4 = arith.constant 0 : index
    %3 = vector.load %arg3[%c0_3, %c0_4] : memref<1x384xf32, #tpu.memory_space<vmem>>, vector<1x384xf32>
    %4 = vector.broadcast %3 : vector<1x384xf32> to vector<8x384xf32>
    %5 = arith.addf %2, %4 : vector<8x384xf32>
    %6 = vector.extract_strided_slice %5 {offsets = [0, 0], sizes = [8, 128], strides = [1, 1]} : vector<8x384xf32> to vector<8x128xf32>
    %cst_5 = arith.constant 0.000000e+00 : f32
    %7 = vector.broadcast %cst_5 : f32 to vector<8x128xf32>
    %8 = arith.maximumf %6, %7 : vector<8x128xf32>
    %9 = vector.extract_strided_slice %5 {offsets = [0, 128], sizes = [8, 128], strides = [1, 1]} : vector<8x384xf32> to vector<8x128xf32>
    %cst_6 = arith.constant 0.000000e+00 : f32
    %10 = vector.broadcast %cst_6 : f32 to vector<8x128xf32>
    %11 = arith.maximumf %9, %10 : vector<8x128xf32>
    %12 = vector.extract_strided_slice %5 {offsets = [0, 256], sizes = [8, 128], strides = [1, 1]} : vector<8x384xf32> to vector<8x128xf32>
    %cst_7 = arith.constant 0.000000e+00 : f32
    %13 = vector.broadcast %cst_7 : f32 to vector<8x128xf32>
    %14 = arith.maximumf %12, %13 : vector<8x128xf32>
    %15 = tpu.concatenate %8, %11, %14 in 0 : vector<8x128xf32>, vector<8x128xf32>, vector<8x128xf32> -> vector<24x128xf32>
    %c0_8 = arith.constant 0 : index
    %c0_9 = arith.constant 0 : index
    %16 = vector.load %arg4[%c0_8, %c0_9] : memref<128x384xf32, #tpu.memory_space<vmem>>, vector<128x384xf32>
    %cst_10 = arith.constant dense<0.000000e+00> : vector<24x384xf32>
    %17 = tpu.matmul %15, %16, %cst_10 {dimension_numbers = #tpu.dot_dimension_numbers<[1], [0], [0], [1], [0, 0, 1, 1], [], []>} : vector<24x128xf32>, vector<128x384xf32>, vector<24x384xf32> -> vector<24x384xf32>
    %18 = vector.extract_strided_slice %17 {offsets = [0, 0], sizes = [8, 128], strides = [1, 1]} : vector<24x384xf32> to vector<8x128xf32>
    %cst_11 = arith.constant 0.176776692 : f32
    %19 = vector.broadcast %cst_11 : f32 to vector<8x128xf32>
    %20 = arith.mulf %18, %19 : vector<8x128xf32>
    %21 = vector.extract_strided_slice %17 {offsets = [8, 0], sizes = [8, 128], strides = [1, 1]} : vector<24x384xf32> to vector<8x128xf32>
    %cst_12 = arith.constant 0.176776692 : f32
    %22 = vector.broadcast %cst_12 : f32 to vector<8x128xf32>
    %23 = arith.mulf %21, %22 : vector<8x128xf32>
    %24 = vector.extract_strided_slice %17 {offsets = [16, 0], sizes = [8, 128], strides = [1, 1]} : vector<24x384xf32> to vector<8x128xf32>
    %cst_13 = arith.constant 0.176776692 : f32
    %25 = vector.broadcast %cst_13 : f32 to vector<8x128xf32>
    %26 = arith.mulf %24, %25 : vector<8x128xf32>
    %27 = vector.extract_strided_slice %17 {offsets = [0, 128], sizes = [8, 128], strides = [1, 1]} : vector<24x384xf32> to vector<8x128xf32>
    %28 = vector.extract_strided_slice %17 {offsets = [8, 128], sizes = [8, 128], strides = [1, 1]} : vector<24x384xf32> to vector<8x128xf32>
    %29 = vector.extract_strided_slice %17 {offsets = [16, 128], sizes = [8, 128], strides = [1, 1]} : vector<24x384xf32> to vector<8x128xf32>
    %30 = vector.extract_strided_slice %17 {offsets = [0, 256], sizes = [8, 128], strides = [1, 1]} : vector<24x384xf32> to vector<8x128xf32>
    %31 = vector.extract_strided_slice %17 {offsets = [8, 256], sizes = [8, 128], strides = [1, 1]} : vector<24x384xf32> to vector<8x128xf32>
    %32 = vector.extract_strided_slice %17 {offsets = [16, 256], sizes = [8, 128], strides = [1, 1]} : vector<24x384xf32> to vector<8x128xf32>
    %cst_14 = arith.constant 0.000000e+00 : f32
    %33 = vector.broadcast %cst_14 : f32 to vector<8x128xf32>
    %34 = arith.mulf %20, %27 : vector<8x128xf32>
    %cst_15 = arith.constant dense<0.000000e+00> : vector<8xf32>
    %35 = vector.multi_reduction <add>, %34, %cst_15 [1] : vector<8x128xf32> to vector<8xf32>
    %36 = vector.shape_cast %35 : vector<8xf32> to vector<8x1xf32>
    %37 = arith.mulf %20, %28 : vector<8x128xf32>
    %cst_16 = arith.constant dense<0.000000e+00> : vector<8xf32>
    %38 = vector.multi_reduction <add>, %37, %cst_16 [1] : vector<8x128xf32> to vector<8xf32>
    %39 = vector.shape_cast %38 : vector<8xf32> to vector<8x1xf32>
    %40 = arith.mulf %20, %29 : vector<8x128xf32>
    %cst_17 = arith.constant dense<0.000000e+00> : vector<8xf32>
    %41 = vector.multi_reduction <add>, %40, %cst_17 [1] : vector<8x128xf32> to vector<8xf32>
    %42 = vector.shape_cast %41 : vector<8xf32> to vector<8x1xf32>
    %43 = arith.maximumf %36, %39 : vector<8x1xf32>
    %44 = arith.maximumf %43, %42 : vector<8x1xf32>
    %45 = arith.subf %36, %44 : vector<8x1xf32>
    %46 = math.exp %45 : vector<8x1xf32>
    %47 = arith.subf %39, %44 : vector<8x1xf32>
    %48 = math.exp %47 : vector<8x1xf32>
    %49 = arith.subf %42, %44 : vector<8x1xf32>
    %50 = math.exp %49 : vector<8x1xf32>
    %51 = arith.addf %46, %48 : vector<8x1xf32>
    %52 = arith.addf %51, %50 : vector<8x1xf32>
    %53 = tpu.reciprocal %52 : vector<8x1xf32> -> vector<8x1xf32>
    %54 = vector.broadcast %46 : vector<8x1xf32> to vector<8x128xf32>
    %55 = arith.mulf %54, %30 : vector<8x128xf32>
    %56 = vector.broadcast %48 : vector<8x1xf32> to vector<8x128xf32>
    %57 = arith.mulf %56, %31 : vector<8x128xf32>
    %58 = arith.addf %55, %57 : vector<8x128xf32>
    %59 = vector.broadcast %50 : vector<8x1xf32> to vector<8x128xf32>
    %60 = arith.mulf %59, %32 : vector<8x128xf32>
    %61 = arith.addf %58, %60 : vector<8x128xf32>
    %62 = vector.broadcast %53 : vector<8x1xf32> to vector<8x128xf32>
    %63 = arith.mulf %61, %62 : vector<8x128xf32>
    %64 = arith.addf %33, %63 : vector<8x128xf32>
    %65 = arith.mulf %23, %27 : vector<8x128xf32>
    %cst_18 = arith.constant dense<0.000000e+00> : vector<8xf32>
    %66 = vector.multi_reduction <add>, %65, %cst_18 [1] : vector<8x128xf32> to vector<8xf32>
    %67 = vector.shape_cast %66 : vector<8xf32> to vector<8x1xf32>
    %68 = arith.mulf %23, %28 : vector<8x128xf32>
    %cst_19 = arith.constant dense<0.000000e+00> : vector<8xf32>
    %69 = vector.multi_reduction <add>, %68, %cst_19 [1] : vector<8x128xf32> to vector<8xf32>
    %70 = vector.shape_cast %69 : vector<8xf32> to vector<8x1xf32>
    %71 = arith.mulf %23, %29 : vector<8x128xf32>
    %cst_20 = arith.constant dense<0.000000e+00> : vector<8xf32>
    %72 = vector.multi_reduction <add>, %71, %cst_20 [1] : vector<8x128xf32> to vector<8xf32>
    %73 = vector.shape_cast %72 : vector<8xf32> to vector<8x1xf32>
    %74 = arith.maximumf %67, %70 : vector<8x1xf32>
    %75 = arith.maximumf %74, %73 : vector<8x1xf32>
    %76 = arith.subf %67, %75 : vector<8x1xf32>
    %77 = math.exp %76 : vector<8x1xf32>
    %78 = arith.subf %70, %75 : vector<8x1xf32>
    %79 = math.exp %78 : vector<8x1xf32>
    %80 = arith.subf %73, %75 : vector<8x1xf32>
    %81 = math.exp %80 : vector<8x1xf32>
    %82 = arith.addf %77, %79 : vector<8x1xf32>
    %83 = arith.addf %82, %81 : vector<8x1xf32>
    %84 = tpu.reciprocal %83 : vector<8x1xf32> -> vector<8x1xf32>
    %85 = vector.broadcast %77 : vector<8x1xf32> to vector<8x128xf32>
    %86 = arith.mulf %85, %30 : vector<8x128xf32>
    %87 = vector.broadcast %79 : vector<8x1xf32> to vector<8x128xf32>
    %88 = arith.mulf %87, %31 : vector<8x128xf32>
    %89 = arith.addf %86, %88 : vector<8x128xf32>
    %90 = vector.broadcast %81 : vector<8x1xf32> to vector<8x128xf32>
    %91 = arith.mulf %90, %32 : vector<8x128xf32>
    %92 = arith.addf %89, %91 : vector<8x128xf32>
    %93 = vector.broadcast %84 : vector<8x1xf32> to vector<8x128xf32>
    %94 = arith.mulf %92, %93 : vector<8x128xf32>
    %95 = arith.addf %64, %94 : vector<8x128xf32>
    %96 = arith.mulf %26, %27 : vector<8x128xf32>
    %cst_21 = arith.constant dense<0.000000e+00> : vector<8xf32>
    %97 = vector.multi_reduction <add>, %96, %cst_21 [1] : vector<8x128xf32> to vector<8xf32>
    %98 = vector.shape_cast %97 : vector<8xf32> to vector<8x1xf32>
    %99 = arith.mulf %26, %28 : vector<8x128xf32>
    %cst_22 = arith.constant dense<0.000000e+00> : vector<8xf32>
    %100 = vector.multi_reduction <add>, %99, %cst_22 [1] : vector<8x128xf32> to vector<8xf32>
    %101 = vector.shape_cast %100 : vector<8xf32> to vector<8x1xf32>
    %102 = arith.mulf %26, %29 : vector<8x128xf32>
    %cst_23 = arith.constant dense<0.000000e+00> : vector<8xf32>
    %103 = vector.multi_reduction <add>, %102, %cst_23 [1] : vector<8x128xf32> to vector<8xf32>
    %104 = vector.shape_cast %103 : vector<8xf32> to vector<8x1xf32>
    %105 = arith.maximumf %98, %101 : vector<8x1xf32>
    %106 = arith.maximumf %105, %104 : vector<8x1xf32>
    %107 = arith.subf %98, %106 : vector<8x1xf32>
    %108 = math.exp %107 : vector<8x1xf32>
    %109 = arith.subf %101, %106 : vector<8x1xf32>
    %110 = math.exp %109 : vector<8x1xf32>
    %111 = arith.subf %104, %106 : vector<8x1xf32>
    %112 = math.exp %111 : vector<8x1xf32>
    %113 = arith.addf %108, %110 : vector<8x1xf32>
    %114 = arith.addf %113, %112 : vector<8x1xf32>
    %115 = tpu.reciprocal %114 : vector<8x1xf32> -> vector<8x1xf32>
    %116 = vector.broadcast %108 : vector<8x1xf32> to vector<8x128xf32>
    %117 = arith.mulf %116, %30 : vector<8x128xf32>
    %118 = vector.broadcast %110 : vector<8x1xf32> to vector<8x128xf32>
    %119 = arith.mulf %118, %31 : vector<8x128xf32>
    %120 = arith.addf %117, %119 : vector<8x128xf32>
    %121 = vector.broadcast %112 : vector<8x1xf32> to vector<8x128xf32>
    %122 = arith.mulf %121, %32 : vector<8x128xf32>
    %123 = arith.addf %120, %122 : vector<8x128xf32>
    %124 = vector.broadcast %115 : vector<8x1xf32> to vector<8x128xf32>
    %125 = arith.mulf %123, %124 : vector<8x128xf32>
    %126 = arith.addf %95, %125 : vector<8x128xf32>
    %cst_24 = arith.constant 0.333333343 : f32
    %127 = vector.broadcast %cst_24 : f32 to vector<8x128xf32>
    %128 = arith.mulf %126, %127 : vector<8x128xf32>
    %c0_25 = arith.constant 0 : index
    %c0_26 = arith.constant 0 : index
    %129 = vector.load %arg5[%c0_25, %c0_26] : memref<128x128xf32, #tpu.memory_space<vmem>>, vector<128x128xf32>
    %cst_27 = arith.constant dense<0.000000e+00> : vector<8x128xf32>
    %130 = tpu.matmul %128, %129, %cst_27 {dimension_numbers = #tpu.dot_dimension_numbers<[1], [0], [0], [1], [0, 0, 1, 1], [], []>} : vector<8x128xf32>, vector<128x128xf32>, vector<8x128xf32> -> vector<8x128xf32>
    %c0_28 = arith.constant 0 : index
    %c0_29 = arith.constant 0 : index
    %131 = vector.load %arg6[%c0_28, %c0_29] : memref<1x128xf32, #tpu.memory_space<vmem>>, vector<1x128xf32>
    %132 = vector.broadcast %131 : vector<1x128xf32> to vector<8x128xf32>
    %133 = arith.addf %130, %132 : vector<8x128xf32>
    %c0_30 = arith.constant 0 : index
    %c0_31 = arith.constant 0 : index
    %134 = vector.load %arg7[%c0_30, %c0_31] : memref<8x128xf32, #tpu.memory_space<vmem>>, vector<8x128xf32>
    tpu.vector_store %arg7[%c0_30, %c0_31], %133 {strides = array<i32>} : memref<8x128xf32, #tpu.memory_space<vmem>>, vector<8x128xf32>,
    return
  }
  func.func @transform_0(%arg0: i32) -> (i32, i32) {
    %c0_i32 = arith.constant 0 : i32
    %c0_i32_0 = arith.constant 0 : i32
    return %arg0, %c0_i32 : i32, i32
  }
  func.func @transform_1(%arg0: i32) -> (i32, i32) {
    %c0_i32 = arith.constant 0 : i32
    %c0_i32_0 = arith.constant 0 : i32
    %c0_i32_1 = arith.constant 0 : i32
    return %c0_i32, %c0_i32_0 : i32, i32
  }
  func.func @transform_2(%arg0: i32) -> (i32, i32) {
    %c0_i32 = arith.constant 0 : i32
    %c0_i32_0 = arith.constant 0 : i32
    %c0_i32_1 = arith.constant 0 : i32
    return %c0_i32, %c0_i32_0 : i32, i32
  }
  func.func @transform_3(%arg0: i32) -> (i32, i32) {
    %c0_i32 = arith.constant 0 : i32
    %c0_i32_0 = arith.constant 0 : i32
    %c0_i32_1 = arith.constant 0 : i32
    return %c0_i32, %c0_i32_0 : i32, i32
  }
  func.func @transform_4(%arg0: i32) -> (i32, i32) {
    %c0_i32 = arith.constant 0 : i32
    %c0_i32_0 = arith.constant 0 : i32
    %c0_i32_1 = arith.constant 0 : i32
    return %c0_i32, %c0_i32_0 : i32, i32
  }
  func.func @transform_5(%arg0: i32) -> (i32, i32) {
    %c0_i32 = arith.constant 0 : i32
    %c0_i32_0 = arith.constant 0 : i32
    %c0_i32_1 = arith.constant 0 : i32
    return %c0_i32, %c0_i32_0 : i32, i32
  }
  func.func @transform_6(%arg0: i32) -> (i32, i32) {
    %c0_i32 = arith.constant 0 : i32
    %c0_i32_0 = arith.constant 0 : i32
    return %arg0, %c0_i32 : i32, i32
  }
}

</mosaic_0001>

<llo_original>
// kernel: tpu_custom_call.1
$region0: #{tpu_custom_call.1}
  #allocation0 [shape = 'u32[]', space=smem, size = 0x4, offset = 0x4, fixed_abs, tag = 'smem constant byte address 0x4 - core index']
  #allocation1 [shape = 'u32[144,128]{1,0:T(1,128)}', space=vmem, size = 0x12000, scoped, tag = 'internal scratch']
  %s0 = inlined_call_operand.hbm [shape: f32[16,128], index: 0, kind: input, shape index: {}]
  %s1 = inlined_call_operand.hbm [shape: f32[128,384], index: 1, kind: input, shape index: {}]
  %s2 = inlined_call_operand.vmem [shape: f32[1,384], index: 2, kind: input, shape index: {}]
  %s3 = inlined_call_operand.hbm [shape: f32[128,384], index: 3, kind: input, shape index: {}]
  %s4 = inlined_call_operand.hbm [shape: f32[128,128], index: 4, kind: input, shape index: {}]
  %s5 = inlined_call_operand.vmem [shape: f32[1,128], index: 5, kind: input, shape index: {}]
  %s6 = inlined_call_operand.hbm [shape: f32[16,128], index: 6, kind: output, shape index: {}]
  %s7 = sld [smem:[#allocation0]]
  $region73: #{tpu_custom_call.1} parent=0
    _
  %s9 = ssub.s32 1, %s7
  %s10 = scalar_select 0, %s9, %s7
  $region1: #{tpu_custom_call.1} parent=0
    #allocation2 [shape = 'u8[8192]{0}', space=vmem, size = 0x2000, scoped, tag = 'input window, operand 0']
    #allocation3 [shape = 's32[2]{0}', space=sflag, size = 0x8, scoped, tag = 'scoped memory for tpu_custom_call.1']
    #allocation4 [shape = 's32[2]{0}', space=sflag, size = 0x8, scoped, tag = 'scoped memory for tpu_custom_call.1']
    #allocation5 [shape = 'u8[196608]{0}', space=vmem, size = 0x30000, scoped, tag = 'input window, operand 1, single buffered']
    #allocation6 [shape = 's32[1]{0}', space=sflag, size = 0x4, scoped, tag = 'scoped memory for tpu_custom_call.1']
    #allocation7 [shape = 'u8[196608]{0}', space=vmem, size = 0x30000, scoped, tag = 'input window, operand 3, single buffered']
    #allocation8 [shape = 'u8[65536]{0}', space=vmem, size = 0x10000, scoped, tag = 'input window, operand 4, single buffered']
    #allocation9 [shape = 's32[1]{0}', space=sflag, size = 0x4, scoped, tag = 'scoped memory for tpu_custom_call.1']
    #allocation10 [shape = 'u8[8192]{0}', space=vmem, size = 0x2000, scoped, tag = 'output window, operand 0']
    %11 = vsyncpa [#allocation3], 0
    %s12 = scalar_lea.sflag [#allocation3], 1
    %13 = vsyncpa %s12, 0
    %14 = vsyncpa [#allocation6], 0
    %15 = vsyncpa [#allocation9], 0
    %16 = vsyncpa [#allocation4], 0
    %s17 = scalar_lea.sflag [#allocation4], 1
    %18 = vsyncpa %s17, 0
    loop: start=0, step=1, limit=4
    $region2: #{tpu_custom_call.1} parent=1 // loop_pre_header
      _
    $region3: #{tpu_custom_call.1} parent=1 // loop_header
      %s20 = sphi 0, %s24
      %p21 = scmp.ge.s32.totalorder %s20, 4
      %s30 = sphi 0, %s32
      %s33 = sphi 0, %s30
      %s34 = sphi 0, %s33
      %s50 = sphi 0, %s34
      %s54 = sphi 0, %s54
      %s56 = sphi 0, %s54
      %s57 = sphi 0, %s56
      %s71 = sphi 0, %s57
      %s75 = sphi 0, %s75
      %s77 = sphi 0, %s75
      %s78 = sphi 0, %s77
      %s92 = sphi 0, %s78
      %s96 = sphi 0, %s96
      %s98 = sphi 0, %s96
      %s99 = sphi 0, %s98
      %s113 = sphi 0, %s99
      %s117 = sphi 0, %s117
      %s119 = sphi 0, %s117
      %s120 = sphi 0, %s119
      %s134 = sphi 0, %s120
      %s138 = sphi 0, %s138
      %s140 = sphi 0, %s138
      %s141 = sphi 0, %s140
      %s155 = sphi 0, %s141
      %s161 = sphi 0, %s163
      %s164 = sphi 0, %s161
      %s165 = sphi 0, %s164
      %s181 = sphi 0, %s165
    $region4: #{tpu_custom_call.1} parent=1 // loop_header_branch
      %23 = sbr.rel (%p21) target = $region8
    $region5: #{tpu_custom_call.1} parent=1 // loop_body
      %s25 = ssub.s32 %s20, 1
      %s26 = ssub.s32 %s20, 2
      %s27 = sadd.s32 %s20, 1
      %s28 = ssub.s32 %s20, %s27
      %p29 = scmp.eq.s32.totalorder %s28, 0
      %s31 = sadd.s32 %s30, 1
      %s32 = scalar_select %p29, %s30, %s31
      %p35 = pneg %p29
      %p36 = scmp.eq.s32.totalorder %s20, 1
      %p37 = por %p35, %p36
      %p38 = scmp.ne.s32.totalorder %s30, %s33
      %p39 = scmp.eq.s32.totalorder %s20, 0
      %p40 = por %p38, %p39
      %p41 = scmp.ne.s32.totalorder %s30, %s33
      %p42 = scmp.eq.s32.totalorder %s25, 1
      %p43 = por %p41, %p42
      %p44 = scmp.ne.s32.totalorder %s33, %s34
      %p45 = scmp.eq.s32.totalorder %s25, 0
      %p46 = por %p44, %p45
      %p47 = scmp.ne.s32.totalorder %s33, %s34
      %p48 = scmp.eq.s32.totalorder %s26, 1
      %p49 = por %p47, %p48
      %p51 = scmp.ne.s32.totalorder %s34, %s50
      %p52 = scmp.eq.s32.totalorder %s26, 0
      %p53 = por %p51, %p52
      %s55 = sadd.s32 %s54, 1
      %p58 = scmp.eq.s32.totalorder %s20, 1
      %p59 = scmp.ne.s32.totalorder %s54, %s56
      %p60 = scmp.eq.s32.totalorder %s20, 0
      %p61 = por %p59, %p60
      %p62 = scmp.ne.s32.totalorder %s54, %s56
      %p63 = scmp.eq.s32.totalorder %s25, 1
      %p64 = por %p62, %p63
      %p65 = scmp.ne.s32.totalorder %s56, %s57
      %p66 = scmp.eq.s32.totalorder %s25, 0
      %p67 = por %p65, %p66
      %p68 = scmp.ne.s32.totalorder %s56, %s57
      %p69 = scmp.eq.s32.totalorder %s26, 1
      %p70 = por %p68, %p69
      %p72 = scmp.ne.s32.totalorder %s57, %s71
      %p73 = scmp.eq.s32.totalorder %s26, 0
      %p74 = por %p72, %p73
      %s76 = sadd.s32 %s75, 1
      %p79 = scmp.eq.s32.totalorder %s20, 1
      %p80 = scmp.ne.s32.totalorder %s75, %s77
      %p81 = scmp.eq.s32.totalorder %s20, 0
      %p82 = por %p80, %p81
      %p83 = scmp.ne.s32.totalorder %s75, %s77
      %p84 = scmp.eq.s32.totalorder %s25, 1
      %p85 = por %p83, %p84
      %p86 = scmp.ne.s32.totalorder %s77, %s78
      %p87 = scmp.eq.s32.totalorder %s25, 0
      %p88 = por %p86, %p87
      %p89 = scmp.ne.s32.totalorder %s77, %s78
      %p90 = scmp.eq.s32.totalorder %s26, 1
      %p91 = por %p89, %p90
      %p93 = scmp.ne.s32.totalorder %s78, %s92
      %p94 = scmp.eq.s32.totalorder %s26, 0
      %p95 = por %p93, %p94
      %s97 = sadd.s32 %s96, 1
      %p100 = scmp.eq.s32.totalorder %s20, 1
      %p101 = scmp.ne.s32.totalorder %s96, %s98
      %p102 = scmp.eq.s32.totalorder %s20, 0
      %p103 = por %p101, %p102
      %p104 = scmp.ne.s32.totalorder %s96, %s98
      %p105 = scmp.eq.s32.totalorder %s25, 1
      %p106 = por %p104, %p105
      %p107 = scmp.ne.s32.totalorder %s98, %s99
      %p108 = scmp.eq.s32.totalorder %s25, 0
      %p109 = por %p107, %p108
      %p110 = scmp.ne.s32.totalorder %s98, %s99
      %p111 = scmp.eq.s32.totalorder %s26, 1
      %p112 = por %p110, %p111
      %p114 = scmp.ne.s32.totalorder %s99, %s113
      %p115 = scmp.eq.s32.totalorder %s26, 0
      %p116 = por %p114, %p115
      %s118 = sadd.s32 %s117, 1
      %p121 = scmp.eq.s32.totalorder %s20, 1
      %p122 = scmp.ne.s32.totalorder %s117, %s119
      %p123 = scmp.eq.s32.totalorder %s20, 0
      %p124 = por %p122, %p123
      %p125 = scmp.ne.s32.totalorder %s117, %s119
      %p126 = scmp.eq.s32.totalorder %s25, 1
      %p127 = por %p125, %p126
      %p128 = scmp.ne.s32.totalorder %s119, %s120
      %p129 = scmp.eq.s32.totalorder %s25, 0
      %p130 = por %p128, %p129
      %p131 = scmp.ne.s32.totalorder %s119, %s120
      %p132 = scmp.eq.s32.totalorder %s26, 1
      %p133 = por %p131, %p132
      %p135 = scmp.ne.s32.totalorder %s120, %s134
      %p136 = scmp.eq.s32.totalorder %s26, 0
      %p137 = por %p135, %p136
      %s139 = sadd.s32 %s138, 1
      %p142 = scmp.eq.s32.totalorder %s20, 1
      %p143 = scmp.ne.s32.totalorder %s138, %s140
      %p144 = scmp.eq.s32.totalorder %s20, 0
      %p145 = por %p143, %p144
      %p146 = scmp.ne.s32.totalorder %s138, %s140
      %p147 = scmp.eq.s32.totalorder %s25, 1
      %p148 = por %p146, %p147
      %p149 = scmp.ne.s32.totalorder %s140, %s141
      %p150 = scmp.eq.s32.totalorder %s25, 0
      %p151 = por %p149, %p150
      %p152 = scmp.ne.s32.totalorder %s140, %s141
      %p153 = scmp.eq.s32.totalorder %s26, 1
      %p154 = por %p152, %p153
      %p156 = scmp.ne.s32.totalorder %s141, %s155
      %p157 = scmp.eq.s32.totalorder %s26, 0
      %p158 = por %p156, %p157
      %s159 = ssub.s32 %s20, %s27
      %p160 = scmp.eq.s32.totalorder %s159, 0
      %s162 = sadd.s32 %s161, 1
      %s163 = scalar_select %p160, %s161, %s162
      %p166 = pneg %p160
      %p167 = scmp.eq.s32.totalorder %s20, 1
      %p168 = por %p166, %p167
      %p169 = scmp.ne.s32.totalorder %s161, %s164
      %p170 = scmp.eq.s32.totalorder %s20, 0
      %p171 = por %p169, %p170
      %p172 = scmp.ne.s32.totalorder %s161, %s164
      %p173 = scmp.eq.s32.totalorder %s25, 1
      %p174 = por %p172, %p173
      %p175 = scmp.ne.s32.totalorder %s164, %s165
      %p176 = scmp.eq.s32.totalorder %s25, 0
      %p177 = por %p175, %p176
      %p178 = scmp.ne.s32.totalorder %s164, %s165
      %p179 = scmp.eq.s32.totalorder %s26, 1
      %p180 = por %p178, %p179
      %p182 = scmp.ne.s32.totalorder %s165, %s181
      %p183 = scmp.eq.s32.totalorder %s26, 0
      %p184 = por %p182, %p183
      %p185 = scmp.le.s32.totalorder 1, %s20
      %p186 = scmp.lt.s32.totalorder %s20, 3
      %p187 = pnand %p185, %p186
      %p188 = pneg %p187
      // Predicated region
      $region9: #{tpu_custom_call.1} parent=5 // pred_check
        _
      $region10: #{tpu_custom_call.1} parent=5 // pred_check_branch
        %190 = sbr.rel (%p187) target = $region12
      $region11: #{tpu_custom_call.1} parent=5 // pred_region
        %s191 = ssub.s32 %s20, 1
        // Predicated region
        $region13: #{tpu_custom_call.1} parent=11 // pred_check
          %p192 = pneg %p67
        $region14: #{tpu_custom_call.1} parent=11 // pred_check_branch
          %194 = sbr.rel (%p192) target = $region16
        $region15: #{tpu_custom_call.1} parent=11 // pred_region
          %s196 = ssub.s32 6144, 6144
          %197 = vsyncadd [#allocation6], %s196
          %s198 = sshll.u32 [#allocation5], 4
          %s199 = int_to_ptr.vmem [resolvable:$true] %s198
          %204 = dma.hbm_to_vmem [thread:$0]  %s1, 6144, %s199, [#allocation6], 384, 384, 24
        $region16: #{tpu_custom_call.1} parent=11 // pred_fallthru
          _
        // Predicated region
        $region17: #{tpu_custom_call.1} parent=11 // pred_check
          %p205 = pneg %p88
        $region18: #{tpu_custom_call.1} parent=11 // pred_check_branch
          %207 = sbr.rel (%p205) target = $region20
        $region19: #{tpu_custom_call.1} parent=11 // pred_region
          _
        $region20: #{tpu_custom_call.1} parent=11 // pred_fallthru
          _
        // Predicated region
        $region21: #{tpu_custom_call.1} parent=11 // pred_check
          %p208 = pneg %p109
        $region22: #{tpu_custom_call.1} parent=11 // pred_check_branch
          %210 = sbr.rel (%p208) target = $region24
        $region23: #{tpu_custom_call.1} parent=11 // pred_region
          %s212 = ssub.s32 6144, 6144
          %213 = vsyncadd [#allocation6], %s212
          %s214 = sshll.u32 [#allocation7], 4
          %s215 = int_to_ptr.vmem [resolvable:$true] %s214
          %220 = dma.hbm_to_vmem [thread:$0]  %s3, 6144, %s215, [#allocation6], 384, 384, 24
        $region24: #{tpu_custom_call.1} parent=11 // pred_fallthru
          _
        // Predicated region
        $region25: #{tpu_custom_call.1} parent=11 // pred_check
          %p221 = pneg %p130
        $region26: #{tpu_custom_call.1} parent=11 // pred_check_branch
          %223 = sbr.rel (%p221) target = $region28
        $region27: #{tpu_custom_call.1} parent=11 // pred_region
          %s225 = ssub.s32 2048, 2048
          %226 = vsyncadd [#allocation9], %s225
          %s227 = sshll.u32 [#allocation8], 4
          %s228 = int_to_ptr.vmem [resolvable:$true] %s227
          %233 = dma.hbm_to_vmem [thread:$0]  %s4, 2048, %s228, [#allocation9], 128, 128, 8
        $region28: #{tpu_custom_call.1} parent=11 // pred_fallthru
          _
        // Predicated region
        $region29: #{tpu_custom_call.1} parent=11 // pred_check
          %p234 = pneg %p151
        $region30: #{tpu_custom_call.1} parent=11 // pred_check_branch
          %236 = sbr.rel (%p234) target = $region32
        $region31: #{tpu_custom_call.1} parent=11 // pred_region
          _
        $region32: #{tpu_custom_call.1} parent=11 // pred_fallthru
          _
      $region12: #{tpu_custom_call.1} parent=5 // pred_fallthru
        _
      %p237 = scmp.lt.s32.totalorder %s20, 2
      // Predicated region
      $region33: #{tpu_custom_call.1} parent=5 // pred_check
        %p238 = pneg %p237
      $region34: #{tpu_custom_call.1} parent=5 // pred_check_branch
        %240 = sbr.rel (%p238) target = $region36
      $region35: #{tpu_custom_call.1} parent=5 // pred_region
        // Predicated region
        $region37: #{tpu_custom_call.1} parent=35 // pred_check
          %p241 = pneg %p40
        $region38: #{tpu_custom_call.1} parent=35 // pred_check_branch
          %243 = sbr.rel (%p241) target = $region40
        $region39: #{tpu_custom_call.1} parent=35 // pred_region
          %s244 = sand.u32 %s30, 1
          %s245 = scalar_lea.sflag [#allocation3], %s244
          %s246 = sand.u32 %s30, 1
          %s247 = smul.addr %s246, 8
          %s248 = scalar_lea.vmem [#allocation2], %s247
          %s250 = ssub.s32 128, 128
          %251 = vsyncadd %s245, %s250
          %s252 = smul.addr %s20, 128
          %s253 = scalar_lea.hbm %s0, %s252
          %s255 = sshll.u32 %s248, 4
          %s256 = int_to_ptr.vmem [resolvable:$true] %s255
          %258 = dma.hbm_to_vmem [thread:$0]  %s253, 128, %s256, %s245
        $region40: #{tpu_custom_call.1} parent=35 // pred_fallthru
          _
      $region36: #{tpu_custom_call.1} parent=5 // pred_fallthru
        _
      %p259 = scmp.le.s32.totalorder 1, %s20
      %p260 = scmp.lt.s32.totalorder %s20, 3
      %p261 = pnand %p259, %p260
      %p262 = pneg %p261
      // Predicated region
      $region41: #{tpu_custom_call.1} parent=5 // pred_check
        _
      $region42: #{tpu_custom_call.1} parent=5 // pred_check_branch
        %264 = sbr.rel (%p261) target = $region44
      $region43: #{tpu_custom_call.1} parent=5 // pred_region
        %s265 = ssub.s32 %s20, 1
        %s266 = sand.u32 %s33, 1
        %s267 = scalar_lea.sflag [#allocation3], %s266
        %s268 = sand.u32 %s33, 1
        %s269 = smul.addr %s268, 8
        %s270 = scalar_lea.vmem [#allocation2], %s269
        // Predicated region
        $region45: #{tpu_custom_call.1} parent=43 // pred_check
          %p271 = pneg %p46
        $region46: #{tpu_custom_call.1} parent=43 // pred_check_branch
          %273 = sbr.rel (%p271) target = $region48
        $region47: #{tpu_custom_call.1} parent=43 // pred_region
          %274 = dma.done %s267, 128
        $region48: #{tpu_custom_call.1} parent=43 // pred_fallthru
          _
        // Predicated region
        $region49: #{tpu_custom_call.1} parent=43 // pred_check
          %p275 = pneg %p67
        $region50: #{tpu_custom_call.1} parent=43 // pred_check_branch
          %277 = sbr.rel (%p275) target = $region52
        $region51: #{tpu_custom_call.1} parent=43 // pred_region
          %278 = dma.done [#allocation6], 6144
        $region52: #{tpu_custom_call.1} parent=43 // pred_fallthru
          _
        // Predicated region
        $region53: #{tpu_custom_call.1} parent=43 // pred_check
          %p279 = pneg %p109
        $region54: #{tpu_custom_call.1} parent=43 // pred_check_branch
          %281 = sbr.rel (%p279) target = $region56
        $region55: #{tpu_custom_call.1} parent=43 // pred_region
          %282 = dma.done [#allocation6], 6144
        $region56: #{tpu_custom_call.1} parent=43 // pred_fallthru
          _
        // Predicated region
        $region57: #{tpu_custom_call.1} parent=43 // pred_check
          %p283 = pneg %p130
        $region58: #{tpu_custom_call.1} parent=43 // pred_check_branch
          %285 = sbr.rel (%p283) target = $region60
        $region59: #{tpu_custom_call.1} parent=43 // pred_region
          %286 = dma.done [#allocation9], 2048
        $region60: #{tpu_custom_call.1} parent=43 // pred_fallthru
          _
        %s287 = sand.u32 %s33, 1
        %s288 = scalar_lea.sflag [#allocation3], %s287
        %s289 = sand.u32 %s33, 1
        %s290 = smul.addr %s289, 8
        %s291 = scalar_lea.vmem [#allocation2], %s290
        %p292 = pneg %p46
        %p293 = pneg %p43
        %p294 = pneg %p67
        %p295 = pneg %p64
        %p296 = pneg %p88
        %p297 = pneg %p85
        %p298 = pneg %p109
        %p299 = pneg %p106
        %p300 = pneg %p130
        %p301 = pneg %p127
        %p302 = pneg %p151
        %p303 = pneg %p148
        %p304 = pneg %p177
        %p305 = pneg %p174
        %s306 = sand.u32 %s164, 1
        %s307 = scalar_lea.sflag [#allocation4], %s306
        %s308 = sand.u32 %s164, 1
        %s309 = smul.addr %s308, 8
        %s310 = scalar_lea.vmem [#allocation10], %s309
        %v311 = vld [vmem:[%s270] sm:$0xff]
        %v312 = vld [vmem:[#allocation5] sm:$0xff]
        %v313 = vld [vmem:[#allocation5 + $0x8] sm:$0xff]
        %v314 = vld [vmem:[#allocation5 + $0x10] sm:$0xff]
        %v315 = vld [vmem:[#allocation5 + $0x18] sm:$0xff]
        %v316 = vld [vmem:[#allocation5 + $0x20] sm:$0xff]
        %v317 = vld [vmem:[#allocation5 + $0x28] sm:$0xff]
        %v318 = vld [vmem:[#allocation5 + $0x30] sm:$0xff]
        %v319 = vld [vmem:[#allocation5 + $0x38] sm:$0xff]
        %v320 = vld [vmem:[#allocation5 + $0x40] sm:$0xff]
        %v321 = vld [vmem:[#allocation5 + $0x48] sm:$0xff]
        %v322 = vld [vmem:[#allocation5 + $0x50] sm:$0xff]
        %v323 = vld [vmem:[#allocation5 + $0x58] sm:$0xff]
        %v324 = vld [vmem:[#allocation5 + $0x60] sm:$0xff]
        %v325 = vld [vmem:[#allocation5 + $0x68] sm:$0xff]
        %v326 = vld [vmem:[#allocation5 + $0x70] sm:$0xff]
        %v327 = vld [vmem:[#allocation5 + $0x78] sm:$0xff]
        %v328 = vld [vmem:[#allocation5 + $0x80] sm:$0xff]
        %v329 = vld [vmem:[#allocation5 + $0x88] sm:$0xff]
        %v330 = vld [vmem:[#allocation5 + $0x90] sm:$0xff]
        %v331 = vld [vmem:[#allocation5 + $0x98] sm:$0xff]
        %v332 = vld [vmem:[#allocation5 + $0xa0] sm:$0xff]
        %v333 = vld [vmem:[#allocation5 + $0xa8] sm:$0xff]
        %v334 = vld [vmem:[#allocation5 + $0xb0] sm:$0xff]
        %v335 = vld [vmem:[#allocation5 + $0xb8] sm:$0xff]
        %v336 = vld [vmem:[#allocation5 + $0xc0] sm:$0xff]
        %v337 = vld [vmem:[#allocation5 + $0xc8] sm:$0xff]
        %v338 = vld [vmem:[#allocation5 + $0xd0] sm:$0xff]
        %v339 = vld [vmem:[#allocation5 + $0xd8] sm:$0xff]
        %v340 = vld [vmem:[#allocation5 + $0xe0] sm:$0xff]
        %v341 = vld [vmem:[#allocation5 + $0xe8] sm:$0xff]
        %v342 = vld [vmem:[#allocation5 + $0xf0] sm:$0xff]
        %v343 = vld [vmem:[#allocation5 + $0xf8] sm:$0xff]
        %v344 = vld [vmem:[#allocation5 + $0x100] sm:$0xff]
        %v345 = vld [vmem:[#allocation5 + $0x108] sm:$0xff]
        %v346 = vld [vmem:[#allocation5 + $0x110] sm:$0xff]
        %v347 = vld [vmem:[#allocation5 + $0x118] sm:$0xff]
        %v348 = vld [vmem:[#allocation5 + $0x120] sm:$0xff]
        %v349 = vld [vmem:[#allocation5 + $0x128] sm:$0xff]
        %v350 = vld [vmem:[#allocation5 + $0x130] sm:$0xff]
        %v351 = vld [vmem:[#allocation5 + $0x138] sm:$0xff]
        %v352 = vld [vmem:[#allocation5 + $0x140] sm:$0xff]
        %v353 = vld [vmem:[#allocation5 + $0x148] sm:$0xff]
        %v354 = vld [vmem:[#allocation5 + $0x150] sm:$0xff]
        %v355 = vld [vmem:[#allocation5 + $0x158] sm:$0xff]
        %v356 = vld [vmem:[#allocation5 + $0x160] sm:$0xff]
        %v357 = vld [vmem:[#allocation5 + $0x168] sm:$0xff]
        %v358 = vld [vmem:[#allocation5 + $0x170] sm:$0xff]
        %v359 = vld [vmem:[#allocation5 + $0x178] sm:$0xff]
        %v360 = vld [vmem:[%s2] sm:$0x7]
        %v362 = vlaneseq
        %v363 = vshrl.u32 %v362, 7
        %v364 = vsub.s32 0, %v363
        %v365 = vrot.slane %v360, %v364
        %v366 = vlaneseq
        %v367 = vshrl.u32 %v366, 7
        %v368 = vsub.s32 1, %v367
        %v369 = vrot.slane %v360, %v368
        %v370 = vlaneseq
        %v371 = vshrl.u32 %v370, 7
        %v372 = vsub.s32 2, %v371
        %v373 = vrot.slane %v360, %v372
        %377 = vmatprep.subr.mxu0 %v358
        %378 = vmatpush1.msra.mxu0 %v357
        %379 = vmatprep.subr.mxu0 %v355
        %380 = vmatpush1.msra.mxu0 %v354
        %381 = vmatprep.subr.mxu0 %v352
        %382 = vmatpush1.msra.mxu0 %v351
        %383 = vmatprep.subr.mxu0 %v349
        %384 = vmatpush1.msra.mxu0 %v348
        %385 = vmatprep.subr.mxu0 %v346
        %386 = vmatpush1.msra.mxu0 %v345
        %387 = vmatprep.subr.mxu0 %v343
        %388 = vmatpush1.msra.mxu0 %v342
        %389 = vmatprep.subr.mxu0 %v340
        %390 = vmatpush1.msra.mxu0 %v339
        %391 = vmatprep.subr.mxu0 %v337
        %392 = vmatpush1.msra.mxu0 %v336
        %393 = vmatprep.subr.mxu0 %v334
        %394 = vmatpush1.msra.mxu0 %v333
        %395 = vmatprep.subr.mxu0 %v331
        %396 = vmatpush1.msra.mxu0 %v330
        %397 = vmatprep.subr.mxu0 %v328
        %398 = vmatpush1.msra.mxu0 %v327
        %399 = vmatprep.subr.mxu0 %v325
        %400 = vmatpush1.msra.mxu0 %v324
        %401 = vmatprep.subr.mxu0 %v322
        %402 = vmatpush1.msra.mxu0 %v321
        %403 = vmatprep.subr.mxu0 %v319
        %404 = vmatpush1.msra.mxu0 %v318
        %405 = vmatprep.subr.mxu0 %v316
        %406 = vmatpush1.msra.mxu0 %v315
        %407 = vmatprep.subr.mxu0 %v313
        %408 = vmatpush1.msra.mxu0 %v312
        %409 = vmatprep.subr.mxu0 0.0
        %410 = vmatpush2.msra.mxu0 0.0
        %411 = vmatprep.subr.mxu0 0.0
        %412 = vmatpush2.msra.mxu0 0.0
        %413 = vmatprep.subr.mxu0 0.0
        %414 = vmatpush2.msra.mxu0 0.0
        %415 = vmatprep.subr.mxu0 0.0
        %416 = vmatpush2.msra.mxu0 0.0
        %417 = vmatprep.subr.mxu0 0.0
        %418 = vmatpush2.msra.mxu0 0.0
        %419 = vmatprep.subr.mxu0 0.0
        %420 = vmatpush2.msra.mxu0 0.0
        %421 = vmatprep.subr.mxu0 0.0
        %422 = vmatpush2.msra.mxu0 0.0
        %423 = vmatprep.subr.mxu0 0.0
        %424 = vmatpush2.msra.mxu0 0.0
        %425 = vmatprep.subr.mxu0 0.0
        %426 = vmatpush2.msra.mxu0 0.0
        %427 = vmatprep.subr.mxu0 0.0
        %428 = vmatpush2.msra.mxu0 0.0
        %429 = vmatprep.subr.mxu0 0.0
        %430 = vmatpush2.msra.mxu0 0.0
        %431 = vmatprep.subr.mxu0 0.0
        %432 = vmatpush2.msra.mxu0 0.0
        %433 = vmatprep.subr.mxu0 0.0
        %434 = vmatpush2.msra.mxu0 0.0
        %435 = vmatprep.subr.mxu0 0.0
        %436 = vmatpush2.msra.mxu0 0.0
        %437 = vmatprep.subr.mxu0 0.0
        %438 = vmatpush2.msra.mxu0 0.0
        %439 = vmatprep.subr.mxu0 0.0
        %440 = vmatpush2.msra.mxu0 0.0
        %441 = vmatprep.mubr.f32.mxu0 0.0
        %442 = vmatmul.mubr.f32.gmra.mxu0 %v311
        %v443 = vpop.f32.mrf.mxu0
        %v444 = vadd.f32 %v365, %v443
        %v445 = vpop.f32.mrf.mxu0
        %v446 = vadd.f32 %v369, %v445
        %447 = vdwg.mxu0
        %448 = vmatprep.subr.mxu0 0.0
        %449 = vmatpush1.msra.mxu0 %v359
        %450 = vmatprep.subr.mxu0 0.0
        %451 = vmatpush1.msra.mxu0 %v356
        %452 = vmatprep.subr.mxu0 0.0
        %453 = vmatpush1.msra.mxu0 %v353
        %454 = vmatprep.subr.mxu0 0.0
        %455 = vmatpush1.msra.mxu0 %v350
        %456 = vmatprep.subr.mxu0 0.0
        %457 = vmatpush1.msra.mxu0 %v347
        %458 = vmatprep.subr.mxu0 0.0
        %459 = vmatpush1.msra.mxu0 %v344
        %460 = vmatprep.subr.mxu0 0.0
        %461 = vmatpush1.msra.mxu0 %v341
        %462 = vmatprep.subr.mxu0 0.0
        %463 = vmatpush1.msra.mxu0 %v338
        %464 = vmatprep.subr.mxu0 0.0
        %465 = vmatpush1.msra.mxu0 %v335
        %466 = vmatprep.subr.mxu0 0.0
        %467 = vmatpush1.msra.mxu0 %v332
        %468 = vmatprep.subr.mxu0 0.0
        %469 = vmatpush1.msra.mxu0 %v329
        %470 = vmatprep.subr.mxu0 0.0
        %471 = vmatpush1.msra.mxu0 %v326
        %472 = vmatprep.subr.mxu0 0.0
        %473 = vmatpush1.msra.mxu0 %v323
        %474 = vmatprep.subr.mxu0 0.0
        %475 = vmatpush1.msra.mxu0 %v320
        %476 = vmatprep.subr.mxu0 0.0
        %477 = vmatpush1.msra.mxu0 %v317
        %478 = vmatprep.subr.mxu0 0.0
        %479 = vmatpush1.msra.mxu0 %v314
        %480 = vmatprep.subr.mxu0 0.0
        %481 = vmatpush2.msra.mxu0 0.0
        %482 = vmatprep.subr.mxu0 0.0
        %483 = vmatpush2.msra.mxu0 0.0
        %484 = vmatprep.subr.mxu0 0.0
        %485 = vmatpush2.msra.mxu0 0.0
        %486 = vmatprep.subr.mxu0 0.0
        %487 = vmatpush2.msra.mxu0 0.0
        %488 = vmatprep.subr.mxu0 0.0
        %489 = vmatpush2.msra.mxu0 0.0
        %490 = vmatprep.subr.mxu0 0.0
        %491 = vmatpush2.msra.mxu0 0.0
        %492 = vmatprep.subr.mxu0 0.0
        %493 = vmatpush2.msra.mxu0 0.0
        %494 = vmatprep.subr.mxu0 0.0
        %495 = vmatpush2.msra.mxu0 0.0
        %496 = vmatprep.subr.mxu0 0.0
        %497 = vmatpush2.msra.mxu0 0.0
        %498 = vmatprep.subr.mxu0 0.0
        %499 = vmatpush2.msra.mxu0 0.0
        %500 = vmatprep.subr.mxu0 0.0
        %501 = vmatpush2.msra.mxu0 0.0
        %502 = vmatprep.subr.mxu0 0.0
        %503 = vmatpush2.msra.mxu0 0.0
        %504 = vmatprep.subr.mxu0 0.0
        %505 = vmatpush2.msra.mxu0 0.0
        %506 = vmatprep.subr.mxu0 0.0
        %507 = vmatpush2.msra.mxu0 0.0
        %508 = vmatprep.subr.mxu0 0.0
        %509 = vmatpush2.msra.mxu0 0.0
        %510 = vmatprep.subr.mxu0 0.0
        %511 = vmatpush2.msra.mxu0 0.0
        %512 = vmatprep.mubr.f32.mxu0 0.0
        %513 = vmatmul.mubr.f32.gmra.mxu0 %v311
        %v514 = vpop.f32.mrf.mxu0
        %v515 = vadd.f32 %v373, %v514
        %v516 = vpop.f32.mrf.mxu0
        %517 = vdwg.mxu0
        %v518 = vmax.f32 %v444, 0.0
        %v519 = vmax.f32 %v446, 0.0
        %v520 = vmax.f32 %v515, 0.0
        %v521 = vld [vmem:[#allocation7] sm:$0xff]
        %v522 = vld [vmem:[#allocation7 + $0x8] sm:$0xff]
        %v523 = vld [vmem:[#allocation7 + $0x10] sm:$0xff]
        %v524 = vld [vmem:[#allocation7 + $0x18] sm:$0xff]
        %v525 = vld [vmem:[#allocation7 + $0x20] sm:$0xff]
        %v526 = vld [vmem:[#allocation7 + $0x28] sm:$0xff]
        %v527 = vld [vmem:[#allocation7 + $0x30] sm:$0xff]
        %v528 = vld [vmem:[#allocation7 + $0x38] sm:$0xff]
        %v529 = vld [vmem:[#allocation7 + $0x40] sm:$0xff]
        %v530 = vld [vmem:[#allocation7 + $0x48] sm:$0xff]
        %v531 = vld [vmem:[#allocation7 + $0x50] sm:$0xff]
        %v532 = vld [vmem:[#allocation7 + $0x58] sm:$0xff]
        %v533 = vld [vmem:[#allocation7 + $0x60] sm:$0xff]
        %v534 = vld [vmem:[#allocation7 + $0x68] sm:$0xff]
        %v535 = vld [vmem:[#allocation7 + $0x70] sm:$0xff]
        %v536 = vld [vmem:[#allocation7 + $0x78] sm:$0xff]
        %v537 = vld [vmem:[#allocation7 + $0x80] sm:$0xff]
        %v538 = vld [vmem:[#allocation7 + $0x88] sm:$0xff]
        %v539 = vld [vmem:[#allocation7 + $0x90] sm:$0xff]
        %v540 = vld [vmem:[#allocation7 + $0x98] sm:$0xff]
        %v541 = vld [vmem:[#allocation7 + $0xa0] sm:$0xff]
        %v542 = vld [vmem:[#allocation7 + $0xa8] sm:$0xff]
        %v543 = vld [vmem:[#allocation7 + $0xb0] sm:$0xff]
        %v544 = vld [vmem:[#allocation7 + $0xb8] sm:$0xff]
        %v545 = vld [vmem:[#allocation7 + $0xc0] sm:$0xff]
        %v546 = vld [vmem:[#allocation7 + $0xc8] sm:$0xff]
        %v547 = vld [vmem:[#allocation7 + $0xd0] sm:$0xff]
        %v548 = vld [vmem:[#allocation7 + $0xd8] sm:$0xff]
        %v549 = vld [vmem:[#allocation7 + $0xe0] sm:$0xff]
        %v550 = vld [vmem:[#allocation7 + $0xe8] sm:$0xff]
        %v551 = vld [vmem:[#allocation7 + $0xf0] sm:$0xff]
        %v552 = vld [vmem:[#allocation7 + $0xf8] sm:$0xff]
        %v553 = vld [vmem:[#allocation7 + $0x100] sm:$0xff]
        %v554 = vld [vmem:[#allocation7 + $0x108] sm:$0xff]
        %v555 = vld [vmem:[#allocation7 + $0x110] sm:$0xff]
        %v556 = vld [vmem:[#allocation7 + $0x118] sm:$0xff]
        %v557 = vld [vmem:[#allocation7 + $0x120] sm:$0xff]
        %v558 = vld [vmem:[#allocation7 + $0x128] sm:$0xff]
        %v559 = vld [vmem:[#allocation7 + $0x130] sm:$0xff]
        %v560 = vld [vmem:[#allocation7 + $0x138] sm:$0xff]
        %v561 = vld [vmem:[#allocation7 + $0x140] sm:$0xff]
        %v562 = vld [vmem:[#allocation7 + $0x148] sm:$0xff]
        %v563 = vld [vmem:[#allocation7 + $0x150] sm:$0xff]
        %v564 = vld [vmem:[#allocation7 + $0x158] sm:$0xff]
        %v565 = vld [vmem:[#allocation7 + $0x160] sm:$0xff]
        %v566 = vld [vmem:[#allocation7 + $0x168] sm:$0xff]
        %v567 = vld [vmem:[#allocation7 + $0x170] sm:$0xff]
        %v568 = vld [vmem:[#allocation7 + $0x178] sm:$0xff]
        %569 = vmatprep.subr.mxu0 %v567
        %570 = vmatpush1.msra.mxu0 %v566
        %571 = vmatprep.subr.mxu0 %v564
        %572 = vmatpush1.msra.mxu0 %v563
        %573 = vmatprep.subr.mxu0 %v561
        %574 = vmatpush1.msra.mxu0 %v560
        %575 = vmatprep.subr.mxu0 %v558
        %576 = vmatpush1.msra.mxu0 %v557
        %577 = vmatprep.subr.mxu0 %v555
        %578 = vmatpush1.msra.mxu0 %v554
        %579 = vmatprep.subr.mxu0 %v552
        %580 = vmatpush1.msra.mxu0 %v551
        %581 = vmatprep.subr.mxu0 %v549
        %582 = vmatpush1.msra.mxu0 %v548
        %583 = vmatprep.subr.mxu0 %v546
        %584 = vmatpush1.msra.mxu0 %v545
        %585 = vmatprep.subr.mxu0 %v543
        %586 = vmatpush1.msra.mxu0 %v542
        %587 = vmatprep.subr.mxu0 %v540
        %588 = vmatpush1.msra.mxu0 %v539
        %589 = vmatprep.subr.mxu0 %v537
        %590 = vmatpush1.msra.mxu0 %v536
        %591 = vmatprep.subr.mxu0 %v534
        %592 = vmatpush1.msra.mxu0 %v533
        %593 = vmatprep.subr.mxu0 %v531
        %594 = vmatpush1.msra.mxu0 %v530
        %595 = vmatprep.subr.mxu0 %v528
        %596 = vmatpush1.msra.mxu0 %v527
        %597 = vmatprep.subr.mxu0 %v525
        %598 = vmatpush1.msra.mxu0 %v524
        %599 = vmatprep.subr.mxu0 %v522
        %600 = vmatpush1.msra.mxu0 %v521
        %601 = vmatprep.subr.mxu0 0.0
        %602 = vmatpush2.msra.mxu0 0.0
        %603 = vmatprep.subr.mxu0 0.0
        %604 = vmatpush2.msra.mxu0 0.0
        %605 = vmatprep.subr.mxu0 0.0
        %606 = vmatpush2.msra.mxu0 0.0
        %607 = vmatprep.subr.mxu0 0.0
        %608 = vmatpush2.msra.mxu0 0.0
        %609 = vmatprep.subr.mxu0 0.0
        %610 = vmatpush2.msra.mxu0 0.0
        %611 = vmatprep.subr.mxu0 0.0
        %612 = vmatpush2.msra.mxu0 0.0
        %613 = vmatprep.subr.mxu0 0.0
        %614 = vmatpush2.msra.mxu0 0.0
        %615 = vmatprep.subr.mxu0 0.0
        %616 = vmatpush2.msra.mxu0 0.0
        %617 = vmatprep.subr.mxu0 0.0
        %618 = vmatpush2.msra.mxu0 0.0
        %619 = vmatprep.subr.mxu0 0.0
        %620 = vmatpush2.msra.mxu0 0.0
        %621 = vmatprep.subr.mxu0 0.0
        %622 = vmatpush2.msra.mxu0 0.0
        %623 = vmatprep.subr.mxu0 0.0
        %624 = vmatpush2.msra.mxu0 0.0
        %625 = vmatprep.subr.mxu0 0.0
        %626 = vmatpush2.msra.mxu0 0.0
        %627 = vmatprep.subr.mxu0 0.0
        %628 = vmatpush2.msra.mxu0 0.0
        %629 = vmatprep.subr.mxu0 0.0
        %630 = vmatpush2.msra.mxu0 0.0
        %631 = vmatprep.subr.mxu0 0.0
        %632 = vmatpush2.msra.mxu0 0.0
        %633 = vmatprep.mubr.f32.mxu0 0.0
        %634 = vmatmul.mubr.f32.gmra.mxu0 %v518
        %v635 = vpop.f32.mrf.mxu0
        %v636 = vadd.f32 0.0, %v635
        %v637 = vpop.f32.mrf.mxu0
        %v638 = vadd.f32 0.0, %v637
        %639 = vmatprep.mubr.f32.mxu0 0.0
        %640 = vmatmul.mubr.f32.gmra.mxu0 %v519
        %v641 = vpop.f32.mrf.mxu0
        %v642 = vadd.f32 0.0, %v641
        %v643 = vpop.f32.mrf.mxu0
        %v644 = vadd.f32 0.0, %v643
        %645 = vmatprep.mubr.f32.mxu0 0.0
        %646 = vmatmul.mubr.f32.gmra.mxu0 %v520
        %v647 = vpop.f32.mrf.mxu0
        %v648 = vadd.f32 0.0, %v647
        %v649 = vpop.f32.mrf.mxu0
        %v650 = vadd.f32 0.0, %v649
        %651 = vdwg.mxu0
        %652 = vmatprep.subr.mxu0 0.0
        %653 = vmatpush1.msra.mxu0 %v568
        %654 = vmatprep.subr.mxu0 0.0
        %655 = vmatpush1.msra.mxu0 %v565
        %656 = vmatprep.subr.mxu0 0.0
        %657 = vmatpush1.msra.mxu0 %v562
        %658 = vmatprep.subr.mxu0 0.0
        %659 = vmatpush1.msra.mxu0 %v559
        %660 = vmatprep.subr.mxu0 0.0
        %661 = vmatpush1.msra.mxu0 %v556
        %662 = vmatprep.subr.mxu0 0.0
        %663 = vmatpush1.msra.mxu0 %v553
        %664 = vmatprep.subr.mxu0 0.0
        %665 = vmatpush1.msra.mxu0 %v550
        %666 = vmatprep.subr.mxu0 0.0
        %667 = vmatpush1.msra.mxu0 %v547
        %668 = vmatprep.subr.mxu0 0.0
        %669 = vmatpush1.msra.mxu0 %v544
        %670 = vmatprep.subr.mxu0 0.0
        %671 = vmatpush1.msra.mxu0 %v541
        %672 = vmatprep.subr.mxu0 0.0
        %673 = vmatpush1.msra.mxu0 %v538
        %674 = vmatprep.subr.mxu0 0.0
        %675 = vmatpush1.msra.mxu0 %v535
        %676 = vmatprep.subr.mxu0 0.0
        %677 = vmatpush1.msra.mxu0 %v532
        %678 = vmatprep.subr.mxu0 0.0
        %679 = vmatpush1.msra.mxu0 %v529
        %680 = vmatprep.subr.mxu0 0.0
        %681 = vmatpush1.msra.mxu0 %v526
        %682 = vmatprep.subr.mxu0 0.0
        %683 = vmatpush1.msra.mxu0 %v523
        %684 = vmatprep.subr.mxu0 0.0
        %685 = vmatpush2.msra.mxu0 0.0
        %686 = vmatprep.subr.mxu0 0.0
        %687 = vmatpush2.msra.mxu0 0.0
        %688 = vmatprep.subr.mxu0 0.0
        %689 = vmatpush2.msra.mxu0 0.0
        %690 = vmatprep.subr.mxu0 0.0
        %691 = vmatpush2.msra.mxu0 0.0
        %692 = vmatprep.subr.mxu0 0.0
        %693 = vmatpush2.msra.mxu0 0.0
        %694 = vmatprep.subr.mxu0 0.0
        %695 = vmatpush2.msra.mxu0 0.0
        %696 = vmatprep.subr.mxu0 0.0
        %697 = vmatpush2.msra.mxu0 0.0
        %698 = vmatprep.subr.mxu0 0.0
        %699 = vmatpush2.msra.mxu0 0.0
        %700 = vmatprep.subr.mxu0 0.0
        %701 = vmatpush2.msra.mxu0 0.0
        %702 = vmatprep.subr.mxu0 0.0
        %703 = vmatpush2.msra.mxu0 0.0
        %704 = vmatprep.subr.mxu0 0.0
        %705 = vmatpush2.msra.mxu0 0.0
        %706 = vmatprep.subr.mxu0 0.0
        %707 = vmatpush2.msra.mxu0 0.0
        %708 = vmatprep.subr.mxu0 0.0
        %709 = vmatpush2.msra.mxu0 0.0
        %710 = vmatprep.subr.mxu0 0.0
        %711 = vmatpush2.msra.mxu0 0.0
        %712 = vmatprep.subr.mxu0 0.0
        %713 = vmatpush2.msra.mxu0 0.0
        %714 = vmatprep.subr.mxu0 0.0
        %715 = vmatpush2.msra.mxu0 0.0
        %716 = vmatprep.mubr.f32.mxu0 0.0
        %717 = vmatmul.mubr.f32.gmra.mxu0 %v518
        %v718 = vpop.f32.mrf.mxu0
        %v719 = vadd.f32 0.0, %v718
        %v720 = vpop.f32.mrf.mxu0
        %721 = vmatprep.mubr.f32.mxu0 0.0
        %722 = vmatmul.mubr.f32.gmra.mxu0 %v519
        %v723 = vpop.f32.mrf.mxu0
        %v724 = vadd.f32 0.0, %v723
        %v725 = vpop.f32.mrf.mxu0
        %726 = vmatprep.mubr.f32.mxu0 0.0
        %727 = vmatmul.mubr.f32.gmra.mxu0 %v520
        %v728 = vpop.f32.mrf.mxu0
        %v729 = vadd.f32 0.0, %v728
        %v730 = vpop.f32.mrf.mxu0
        %731 = vdwg.mxu0
        %v732 = vmul.f32 %v636, 0.17677669
        %v733 = vmul.f32 %v642, 0.17677669
        %v734 = vmul.f32 %v648, 0.17677669
        %v735 = vmul.f32 %v732, %v638
        %736 = vadd.xlane.f32.xlu0 %v735
        %v737 = vpop.xlane.xlu0 %736
        %v738 = vmul.f32 %v732, %v644
        %739 = vadd.xlane.f32.xlu0 %v738
        %v740 = vpop.xlane.xlu0 %739
        %v741 = vmul.f32 %v732, %v650
        %742 = vadd.xlane.f32.xlu0 %v741
        %v743 = vpop.xlane.xlu0 %742
        %v744 = vmax.f32 %v737, %v740
        %v745 = vmax.f32 %v744, %v743
        %v746 = vsub.f32 %v737, %v745
        %v747 = vmul.f32 %v746, 1.442695
        %v748 = vpow.pop %v747
        %v749 = vsub.f32 %v740, %v745
        %v750 = vmul.f32 %v749, 1.442695
        %v751 = vpow.pop %v750
        %v752 = vsub.f32 %v743, %v745
        %v753 = vmul.f32 %v752, 1.442695
        %v754 = vpow.pop %v753
        %v755 = vadd.f32 %v748, %v751
        %v756 = vadd.f32 %v755, %v754
        %v757 = vrcp.pop %v756
        %v758 = vmul.f32 %v748, %v719
        %v759 = vmul.f32 %v751, %v724
        %v760 = vadd.f32 %v758, %v759
        %v761 = vmul.f32 %v754, %v729
        %v762 = vadd.f32 %v760, %v761
        %v763 = vmul.f32 %v762, %v757
        %v764 = vadd.f32 %v763, 0.0
        %v765 = vmul.f32 %v733, %v638
        %766 = vadd.xlane.f32.xlu0 %v765
        %v767 = vpop.xlane.xlu0 %766
        %v768 = vmul.f32 %v733, %v644
        %769 = vadd.xlane.f32.xlu0 %v768
        %v770 = vpop.xlane.xlu0 %769
        %v771 = vmul.f32 %v733, %v650
        %772 = vadd.xlane.f32.xlu0 %v771
        %v773 = vpop.xlane.xlu0 %772
        %v774 = vmax.f32 %v767, %v770
        %v775 = vmax.f32 %v774, %v773
        %v776 = vsub.f32 %v767, %v775
        %v777 = vmul.f32 %v776, 1.442695
        %v778 = vpow.pop %v777
        %v779 = vsub.f32 %v770, %v775
        %v780 = vmul.f32 %v779, 1.442695
        %v781 = vpow.pop %v780
        %v782 = vsub.f32 %v773, %v775
        %v783 = vmul.f32 %v782, 1.442695
        %v784 = vpow.pop %v783
        %v785 = vadd.f32 %v778, %v781
        %v786 = vadd.f32 %v785, %v784
        %v787 = vrcp.pop %v786
        %v788 = vmul.f32 %v778, %v719
        %v789 = vmul.f32 %v781, %v724
        %v790 = vadd.f32 %v788, %v789
        %v791 = vmul.f32 %v784, %v729
        %v792 = vadd.f32 %v790, %v791
        %v793 = vmul.f32 %v792, %v787
        %v794 = vadd.f32 %v764, %v793
        %v795 = vmul.f32 %v734, %v638
        %796 = vadd.xlane.f32.xlu0 %v795
        %v797 = vpop.xlane.xlu0 %796
        %v798 = vmul.f32 %v734, %v644
        %799 = vadd.xlane.f32.xlu0 %v798
        %v800 = vpop.xlane.xlu0 %799
        %v801 = vmul.f32 %v734, %v650
        %802 = vadd.xlane.f32.xlu0 %v801
        %v803 = vpop.xlane.xlu0 %802
        %v804 = vmax.f32 %v797, %v800
        %v805 = vmax.f32 %v804, %v803
        %v806 = vsub.f32 %v797, %v805
        %v807 = vmul.f32 %v806, 1.442695
        %v808 = vpow.pop %v807
        %v809 = vsub.f32 %v800, %v805
        %v810 = vmul.f32 %v809, 1.442695
        %v811 = vpow.pop %v810
        %v812 = vsub.f32 %v803, %v805
        %v813 = vmul.f32 %v812, 1.442695
        %v814 = vpow.pop %v813
        %v815 = vadd.f32 %v808, %v811
        %v816 = vadd.f32 %v815, %v814
        %v817 = vrcp.pop %v816
        %v818 = vmul.f32 %v808, %v719
        %v819 = vmul.f32 %v811, %v724
        %v820 = vadd.f32 %v818, %v819
        %v821 = vmul.f32 %v814, %v729
        %v822 = vadd.f32 %v820, %v821
        %v823 = vmul.f32 %v822, %v817
        %v824 = vadd.f32 %v794, %v823
        %v825 = vmul.f32 %v824, 0.33333334
        %v826 = vld [vmem:[#allocation8] sm:$0xff]
        %v827 = vld [vmem:[#allocation8 + $0x8] sm:$0xff]
        %v828 = vld [vmem:[#allocation8 + $0x10] sm:$0xff]
        %v829 = vld [vmem:[#allocation8 + $0x18] sm:$0xff]
        %v830 = vld [vmem:[#allocation8 + $0x20] sm:$0xff]
        %v831 = vld [vmem:[#allocation8 + $0x28] sm:$0xff]
        %v832 = vld [vmem:[#allocation8 + $0x30] sm:$0xff]
        %v833 = vld [vmem:[#allocation8 + $0x38] sm:$0xff]
        %v834 = vld [vmem:[#allocation8 + $0x40] sm:$0xff]
        %v835 = vld [vmem:[#allocation8 + $0x48] sm:$0xff]
        %v836 = vld [vmem:[#allocation8 + $0x50] sm:$0xff]
        %v837 = vld [vmem:[#allocation8 + $0x58] sm:$0xff]
        %v838 = vld [vmem:[#allocation8 + $0x60] sm:$0xff]
        %v839 = vld [vmem:[#allocation8 + $0x68] sm:$0xff]
        %v840 = vld [vmem:[#allocation8 + $0x70] sm:$0xff]
        %v841 = vld [vmem:[#allocation8 + $0x78] sm:$0xff]
        %v842 = vld [vmem:[%s5] sm:$0x1]
        %v844 = vlaneseq
        %v845 = vshrl.u32 %v844, 7
        %v846 = vsub.s32 0, %v845
        %v847 = vrot.slane %v842, %v846
        %849 = vmatprep.subr.mxu0 0.0
        %850 = vmatpush1.msra.mxu0 %v841
        %851 = vmatprep.subr.mxu0 0.0
        %852 = vmatpush1.msra.mxu0 %v840
        %853 = vmatprep.subr.mxu0 0.0
        %854 = vmatpush1.msra.mxu0 %v839
        %855 = vmatprep.subr.mxu0 0.0
        %856 = vmatpush1.msra.mxu0 %v838
        %857 = vmatprep.subr.mxu0 0.0
        %858 = vmatpush1.msra.mxu0 %v837
        %859 = vmatprep.subr.mxu0 0.0
        %860 = vmatpush1.msra.mxu0 %v836
        %861 = vmatprep.subr.mxu0 0.0
        %862 = vmatpush1.msra.mxu0 %v835
        %863 = vmatprep.subr.mxu0 0.0
        %864 = vmatpush1.msra.mxu0 %v834
        %865 = vmatprep.subr.mxu0 0.0
        %866 = vmatpush1.msra.mxu0 %v833
        %867 = vmatprep.subr.mxu0 0.0
        %868 = vmatpush1.msra.mxu0 %v832
        %869 = vmatprep.subr.mxu0 0.0
        %870 = vmatpush1.msra.mxu0 %v831
        %871 = vmatprep.subr.mxu0 0.0
        %872 = vmatpush1.msra.mxu0 %v830
        %873 = vmatprep.subr.mxu0 0.0
        %874 = vmatpush1.msra.mxu0 %v829
        %875 = vmatprep.subr.mxu0 0.0
        %876 = vmatpush1.msra.mxu0 %v828
        %877 = vmatprep.subr.mxu0 0.0
        %878 = vmatpush1.msra.mxu0 %v827
        %879 = vmatprep.subr.mxu0 0.0
        %880 = vmatpush1.msra.mxu0 %v826
        %881 = vmatprep.subr.mxu0 0.0
        %882 = vmatpush2.msra.mxu0 0.0
        %883 = vmatprep.subr.mxu0 0.0
        %884 = vmatpush2.msra.mxu0 0.0
        %885 = vmatprep.subr.mxu0 0.0
        %886 = vmatpush2.msra.mxu0 0.0
        %887 = vmatprep.subr.mxu0 0.0
        %888 = vmatpush2.msra.mxu0 0.0
        %889 = vmatprep.subr.mxu0 0.0
        %890 = vmatpush2.msra.mxu0 0.0
        %891 = vmatprep.subr.mxu0 0.0
        %892 = vmatpush2.msra.mxu0 0.0
        %893 = vmatprep.subr.mxu0 0.0
        %894 = vmatpush2.msra.mxu0 0.0
        %895 = vmatprep.subr.mxu0 0.0
        %896 = vmatpush2.msra.mxu0 0.0
        %897 = vmatprep.subr.mxu0 0.0
        %898 = vmatpush2.msra.mxu0 0.0
        %899 = vmatprep.subr.mxu0 0.0
        %900 = vmatpush2.msra.mxu0 0.0
        %901 = vmatprep.subr.mxu0 0.0
        %902 = vmatpush2.msra.mxu0 0.0
        %903 = vmatprep.subr.mxu0 0.0
        %904 = vmatpush2.msra.mxu0 0.0
        %905 = vmatprep.subr.mxu0 0.0
        %906 = vmatpush2.msra.mxu0 0.0
        %907 = vmatprep.subr.mxu0 0.0
        %908 = vmatpush2.msra.mxu0 0.0
        %909 = vmatprep.subr.mxu0 0.0
        %910 = vmatpush2.msra.mxu0 0.0
        %911 = vmatprep.subr.mxu0 0.0
        %912 = vmatpush2.msra.mxu0 0.0
        %913 = vmatprep.mubr.f32.mxu0 0.0
        %914 = vmatmul.mubr.f32.gmra.mxu0 %v825
        %v915 = vpop.f32.mrf.mxu0
        %v916 = vadd.f32 %v847, %v915
        %v917 = vpop.f32.mrf.mxu0
        %918 = vdwg.mxu0
        %919 = vst [vmem:[%s310] sm:$0xff] %v916
        %s920 = sand.u32 %s164, 1
        %s921 = scalar_lea.sflag [#allocation4], %s920
        %s922 = sand.u32 %s164, 1
        %s923 = smul.addr %s922, 8
        %s924 = scalar_lea.vmem [#allocation10], %s923
        // Predicated region
        $region61: #{tpu_custom_call.1} parent=43 // pred_check
          %p925 = pneg %p174
        $region62: #{tpu_custom_call.1} parent=43 // pred_check_branch
          %927 = sbr.rel (%p925) target = $region64
        $region63: #{tpu_custom_call.1} parent=43 // pred_region
          %s929 = ssub.s32 128, 128
          %930 = vsyncadd %s921, %s929
          %s931 = smul.addr %s25, 128
          %s932 = scalar_lea.hbm %s6, %s931
          %s934 = sshll.u32 %s924, 4
          %s935 = int_to_ptr.vmem [resolvable:$true] %s934
          %937 = dma.vmem_to_hbm [thread:$0]  %s935, 128, %s932, %s921
        $region64: #{tpu_custom_call.1} parent=43 // pred_fallthru
          _
      $region44: #{tpu_custom_call.1} parent=5 // pred_fallthru
        _
      %p938 = scmp.le.s32.totalorder 2, %s20
      // Predicated region
      $region65: #{tpu_custom_call.1} parent=5 // pred_check
        %p939 = pneg %p938
      $region66: #{tpu_custom_call.1} parent=5 // pred_check_branch
        %941 = sbr.rel (%p939) target = $region68
      $region67: #{tpu_custom_call.1} parent=5 // pred_region
        %s942 = ssub.s32 %s20, 2
        // Predicated region
        $region69: #{tpu_custom_call.1} parent=67 // pred_check
          %p943 = pneg %p180
        $region70: #{tpu_custom_call.1} parent=67 // pred_check_branch
          %945 = sbr.rel (%p943) target = $region72
        $region71: #{tpu_custom_call.1} parent=67 // pred_region
          %s946 = sand.u32 %s165, 1
          %s947 = scalar_lea.sflag [#allocation4], %s946
          %s948 = sand.u32 %s165, 1
          %s949 = smul.addr %s948, 8
          %s950 = scalar_lea.vmem [#allocation10], %s949
          %951 = dma.done %s947, 128
        $region72: #{tpu_custom_call.1} parent=67 // pred_fallthru
          _
      $region68: #{tpu_custom_call.1} parent=5 // pred_fallthru
        _
    $region6: #{tpu_custom_call.1} parent=1 // loop_footer
      %s24 = sadd.s32 1, %s20
    $region7: #{tpu_custom_call.1} parent=1 // loop_footer_branch
      %19 = sbr.rel target = $region3
    $region8: #{tpu_custom_call.1} parent=1 // loop_exit
      _
    %952 = vsyncpa [#allocation3], 1
    %s953 = scalar_lea.sflag [#allocation3], 1
    %954 = vsyncpa %s953, 1
    %955 = vsyncpa [#allocation6], 1
    %956 = vsyncpa [#allocation9], 1
    %957 = vsyncpa [#allocation4], 1
    %s958 = scalar_lea.sflag [#allocation4], 1
    %959 = vsyncpa %s958, 1

</llo_original>
